<compile_context>
chip_gen: v5e
topology: v5e:2x2
jax: 0.10.0
libtpu: 0.0.40
codegen_flags: <defaults>
</compile_context>

<pallas_src>
import functools

import jax
import jax.numpy as jnp
from jax.experimental import pallas as pl
from jax.experimental.pallas import tpu as pltpu


def _round_up(x, m):
    return (x + m - 1) // m * m


def _convt_kernel(x_ref, w_ref, b_ref, o_ref, p_ref, *, wp, cin):
    # x_ref: (1, Cin, Sp)    zero-padded, spatially-flattened input (lane-dense)
    # w_ref: (Cout, 9*Cin)   packed effective-conv weight (resident)
    # b_ref: (Cout, 1)       bias
    # o_ref: (1, Cout, Lp)   lane-dense "wide" output (cropped in wrapper)
    # p_ref: (9*Cin, Lp)     VMEM im2col scratch
    lp = o_ref.shape[-1]
    x = x_ref[0]                                   # (Cin, Sp)

    # im2col: tap (kh, kw) is a pure lane shift of kh*Wp + kw on the flattened
    # spatial axis; each write fills full-lane-width rows of the scratch.
    for kh in range(3):
        for kw in range(3):
            t = kh * 3 + kw
            shift = kh * wp + kw
            p_ref[pl.ds(t * cin, cin), :] = x[:, shift:shift + lp]

    # Single fused MXU matmul over K = 9*Cin, lane-dense bias add and store.
    acc = jnp.dot(w_ref[...], p_ref[...], preferred_element_type=jnp.float32)
    acc = acc + b_ref[...]                         # (Cout, 1) broadcast
    o_ref[0] = acc.astype(o_ref.dtype)


def outconv_forward(x_nchw, weight, bias):
    """Forward of nn.ConvTranspose2d(in_ch, out_ch, 3, stride=1, padding=1).

    x_nchw : (N, Cin, H, W)    -- PyTorch NCHW input
    weight : (Cin, Cout, 3, 3) -- PyTorch ConvTranspose2d weight layout
    bias   : (Cout,)
    returns: (N, Cout, H, W)
    """
    N, Cin, H, W = x_nchw.shape
    Cout = weight.shape[1]
    Hp, Wp = H + 2, W + 2
    S = Hp * Wp                                    # flattened padded spatial
    Lp = _round_up(S, 128)                         # lane-dense compute width
    max_shift = 2 * Wp + 2                         # largest flat tap offset
    Sp = Lp + _round_up(max_shift, 128)            # input slab incl. shift room

    # Effective forward-conv weight, packed as (Cout, 9*Cin) with
    # K index = (kh*3 + kw)*Cin + cin  (matches the im2col row order).
    w_eff = jnp.transpose(weight[:, :, ::-1, ::-1], (1, 2, 3, 0))  # (Cout,3,3,Cin)
    w_mat = w_eff.reshape(Cout, 9 * Cin)
    b2 = bias.reshape(Cout, 1)

    # Zero-pad spatially by 1 (k-1-p = 1), flatten spatial onto the lane axis,
    # and zero-pad the flat axis so every shifted window is in bounds and all
    # blocks are 128-lane multiples.
    x_pad = jnp.pad(x_nchw, ((0, 0), (0, 0), (1, 1), (1, 1)))
    x_flat = x_pad.reshape(N, Cin, S)
    x_flat = jnp.pad(x_flat, ((0, 0), (0, 0), (0, Sp - S)))

    kernel = functools.partial(_convt_kernel, wp=Wp, cin=Cin)

    # TODO(synk): for very large decoder feature maps, add an H-tile grid axis
    # with a 2-row halo so the per-step input block fits v7x's 64 MiB VMEM.
    out_wide = pl.pallas_call(
        kernel,
        out_shape=jax.ShapeDtypeStruct((N, Cout, Lp), x_nchw.dtype),
        grid=(N,),
        in_specs=[
            pl.BlockSpec((1, Cin, Sp), lambda n: (n, 0, 0)),
            pl.BlockSpec((Cout, 9 * Cin), lambda n: (0, 0)),
            pl.BlockSpec((Cout, 1), lambda n: (0, 0)),
        ],
        out_specs=pl.BlockSpec((1, Cout, Lp), lambda n: (n, 0, 0)),
        scratch_shapes=[pltpu.VMEM((9 * Cin, Lp), x_nchw.dtype)],
        compiler_params=pltpu.CompilerParams(
            dimension_semantics=("parallel",),
            vmem_limit_bytes=64 * 1024 * 1024),
    )(x_flat, w_mat, b2)

    out = out_wide[:, :, :S].reshape(N, Cout, Hp, Wp)[:, :, :H, :W]
    return out


if __name__ == "__main__":
    key = jax.random.PRNGKey(0)
    k1, k2, k3 = jax.random.split(key, 3)

    N, Cin, Cout, H, W = 2, 4, 8, 16, 16

    x = jax.random.normal(k1, (N, Cin, H, W), jnp.float32)
    # Deterministic synthetic params (shapes from nn.ConvTranspose2d.__init__).
    weight = jax.random.normal(k2, (Cin, Cout, 3, 3), jnp.float32) / jnp.sqrt(
        float(Cin * 9))
    bias = 0.01 * jax.random.normal(k3, (Cout,), jnp.float32)

    out = jax.block_until_ready(outconv_forward(x, weight, bias))

    # Reference: equivalent forward conv via XLA, matching PyTorch semantics.
    w_oihw = jnp.transpose(weight[:, :, ::-1, ::-1], (1, 0, 2, 3))
    ref = jax.lax.conv_general_dilated(
        x, w_oihw, window_strides=(1, 1), padding=((1, 1), (1, 1)),
        dimension_numbers=("NCHW", "OIHW", "NCHW"),
    ) + bias[None, :, None, None]

    assert out.shape == (N, Cout, H, W), out.shape
    assert jnp.allclose(out, ref, atol=1e-4, rtol=1e-4), "mismatch vs reference"
    print("KERNEL_OK")
</pallas_src>

<mosaic_0001>
module attributes {stable_mosaic.version = 11 : i64} {
  func.func @_convt_kernel(%arg0: i32, %arg1: memref<1x4x512xf32, #tpu.memory_space<vmem>>, %arg2: memref<8x36xf32, #tpu.memory_space<vmem>>, %arg3: memref<8x1xf32, #tpu.memory_space<vmem>>, %arg4: memref<1x8x384xf32, #tpu.memory_space<vmem>>, %arg5: memref<36x384xf32, #tpu.memory_space<vmem>>) attributes {dimension_semantics = [#tpu.dimension_semantics<parallel>], iteration_bounds = array<i64: 2>, scalar_prefetch = 0 : i64, scratch_operands = 1 : i64, tpu.core_type = #tpu.core_type<tc>, window_params = [{transform_indices = @transform_0, window_bounds = array<i64: 1, 4, 512>}, {pipeline_mode = #tpu.pipeline_mode<synchronous>, transform_indices = @transform_1, window_bounds = array<i64: 8, 36>}, {pipeline_mode = #tpu.pipeline_mode<synchronous>, transform_indices = @transform_2, window_bounds = array<i64: 8, 1>}, {transform_indices = @transform_3, window_bounds = array<i64: 1, 8, 384>}]} {
    %c0 = arith.constant 0 : index
    %c0_0 = arith.constant 0 : index
    %c0_1 = arith.constant 0 : index
    %0 = vector.load %arg1[%c0, %c0_0, %c0_1] : memref<1x4x512xf32, #tpu.memory_space<vmem>>, vector<1x4x512xf32>
    %1 = vector.shape_cast %0 : vector<1x4x512xf32> to vector<4x512xf32>
    %2 = vector.extract_strided_slice %1 {offsets = [0, 0], sizes = [4, 384], strides = [1, 1]} : vector<4x512xf32> to vector<4x384xf32>
    %c0_2 = arith.constant 0 : index
    %c0_3 = arith.constant 0 : index
    %3 = vector.load %arg5[%c0_2, %c0_3] : memref<36x384xf32, #tpu.memory_space<vmem>>, vector<4x384xf32>
    tpu.vector_store %arg5[%c0_2, %c0_3], %2 {strides = array<i32>} : memref<36x384xf32, #tpu.memory_space<vmem>>, vector<4x384xf32>,
    %4 = vector.extract_strided_slice %1 {offsets = [0, 1], sizes = [4, 384], strides = [1, 1]} : vector<4x512xf32> to vector<4x384xf32>
    %c4 = arith.constant 4 : index
    %c0_4 = arith.constant 0 : index
    %5 = vector.load %arg5[%c4, %c0_4] : memref<36x384xf32, #tpu.memory_space<vmem>>, vector<4x384xf32>
    tpu.vector_store %arg5[%c4, %c0_4], %4 {strides = array<i32>} : memref<36x384xf32, #tpu.memory_space<vmem>>, vector<4x384xf32>,
    %6 = vector.extract_strided_slice %1 {offsets = [0, 2], sizes = [4, 384], strides = [1, 1]} : vector<4x512xf32> to vector<4x384xf32>
    %c8 = arith.constant 8 : index
    %c0_5 = arith.constant 0 : index
    %7 = vector.load %arg5[%c8, %c0_5] : memref<36x384xf32, #tpu.memory_space<vmem>>, vector<4x384xf32>
    tpu.vector_store %arg5[%c8, %c0_5], %6 {strides = array<i32>} : memref<36x384xf32, #tpu.memory_space<vmem>>, vector<4x384xf32>,
    %8 = vector.extract_strided_slice %1 {offsets = [0, 18], sizes = [4, 384], strides = [1, 1]} : vector<4x512xf32> to vector<4x384xf32>
    %c12 = arith.constant 12 : index
    %c0_6 = arith.constant 0 : index
    %9 = vector.load %arg5[%c12, %c0_6] : memref<36x384xf32, #tpu.memory_space<vmem>>, vector<4x384xf32>
    tpu.vector_store %arg5[%c12, %c0_6], %8 {strides = array<i32>} : memref<36x384xf32, #tpu.memory_space<vmem>>, vector<4x384xf32>,
    %10 = vector.extract_strided_slice %1 {offsets = [0, 19], sizes = [4, 384], strides = [1, 1]} : vector<4x512xf32> to vector<4x384xf32>
    %c16 = arith.constant 16 : index
    %c0_7 = arith.constant 0 : index
    %11 = vector.load %arg5[%c16, %c0_7] : memref<36x384xf32, #tpu.memory_space<vmem>>, vector<4x384xf32>
    tpu.vector_store %arg5[%c16, %c0_7], %10 {strides = array<i32>} : memref<36x384xf32, #tpu.memory_space<vmem>>, vector<4x384xf32>,
    %12 = vector.extract_strided_slice %1 {offsets = [0, 20], sizes = [4, 384], strides = [1, 1]} : vector<4x512xf32> to vector<4x384xf32>
    %c20 = arith.constant 20 : index
    %c0_8 = arith.constant 0 : index
    %13 = vector.load %arg5[%c20, %c0_8] : memref<36x384xf32, #tpu.memory_space<vmem>>, vector<4x384xf32>
    tpu.vector_store %arg5[%c20, %c0_8], %12 {strides = array<i32>} : memref<36x384xf32, #tpu.memory_space<vmem>>, vector<4x384xf32>,
    %14 = vector.extract_strided_slice %1 {offsets = [0, 36], sizes = [4, 384], strides = [1, 1]} : vector<4x512xf32> to vector<4x384xf32>
    %c24 = arith.constant 24 : index
    %c0_9 = arith.constant 0 : index
    %15 = vector.load %arg5[%c24, %c0_9] : memref<36x384xf32, #tpu.memory_space<vmem>>, vector<4x384xf32>
    tpu.vector_store %arg5[%c24, %c0_9], %14 {strides = array<i32>} : memref<36x384xf32, #tpu.memory_space<vmem>>, vector<4x384xf32>,
    %16 = vector.extract_strided_slice %1 {offsets = [0, 37], sizes = [4, 384], strides = [1, 1]} : vector<4x512xf32> to vector<4x384xf32>
    %c28 = arith.constant 28 : index
    %c0_10 = arith.constant 0 : index
    %17 = vector.load %arg5[%c28, %c0_10] : memref<36x384xf32, #tpu.memory_space<vmem>>, vector<4x384xf32>
    tpu.vector_store %arg5[%c28, %c0_10], %16 {strides = array<i32>} : memref<36x384xf32, #tpu.memory_space<vmem>>, vector<4x384xf32>,
    %18 = vector.extract_strided_slice %1 {offsets = [0, 38], sizes = [4, 384], strides = [1, 1]} : vector<4x512xf32> to vector<4x384xf32>
    %c32 = arith.constant 32 : index
    %c0_11 = arith.constant 0 : index
    %19 = vector.load %arg5[%c32, %c0_11] : memref<36x384xf32, #tpu.memory_space<vmem>>, vector<4x384xf32>
    tpu.vector_store %arg5[%c32, %c0_11], %18 {strides = array<i32>} : memref<36x384xf32, #tpu.memory_space<vmem>>, vector<4x384xf32>,
    %c0_12 = arith.constant 0 : index
    %c0_13 = arith.constant 0 : index
    %20 = vector.load %arg2[%c0_12, %c0_13] : memref<8x36xf32, #tpu.memory_space<vmem>>, vector<8x36xf32>
    %c0_14 = arith.constant 0 : index
    %c0_15 = arith.constant 0 : index
    %21 = vector.load %arg5[%c0_14, %c0_15] : memref<36x384xf32, #tpu.memory_space<vmem>>, vector<36x384xf32>
    %cst = arith.constant dense<0.000000e+00> : vector<8x384xf32>
    %22 = tpu.matmul %20, %21, %cst {dimension_numbers = #tpu.dot_dimension_numbers<[1], [0], [0], [1], [0, 0, 1, 1], [], []>} : vector<8x36xf32>, vector<36x384xf32>, vector<8x384xf32> -> vector<8x384xf32>
    %c0_16 = arith.constant 0 : index
    %c0_17 = arith.constant 0 : index
    %23 = vector.load %arg3[%c0_16, %c0_17] : memref<8x1xf32, #tpu.memory_space<vmem>>, vector<8x1xf32>
    %24 = vector.broadcast %23 : vector<8x1xf32> to vector<8x384xf32>
    %25 = arith.addf %22, %24 : vector<8x384xf32>
    %c0_18 = arith.constant 0 : index
    %c0_19 = arith.constant 0 : index
    %c0_20 = arith.constant 0 : index
    %26 = vector.load %arg4[%c0_18, %c0_19, %c0_20] : memref<1x8x384xf32, #tpu.memory_space<vmem>>, vector<1x8x384xf32>
    %27 = vector.shape_cast %26 : vector<1x8x384xf32> to vector<8x384xf32>
    %28 = vector.shape_cast %25 : vector<8x384xf32> to vector<1x8x384xf32>
    tpu.vector_store %arg4[%c0_18, %c0_19, %c0_20], %28 {strides = array<i32>} : memref<1x8x384xf32, #tpu.memory_space<vmem>>, vector<1x8x384xf32>,
    return
  }
  func.func @transform_0(%arg0: i32) -> (i32, i32, i32) {
    %c0_i32 = arith.constant 0 : i32
    %c0_i32_0 = arith.constant 0 : i32
    %c0_i32_1 = arith.constant 0 : i32
    return %arg0, %c0_i32, %c0_i32_0 : i32, i32, i32
  }
  func.func @transform_1(%arg0: i32) -> (i32, i32) {
    %c0_i32 = arith.constant 0 : i32
    %c0_i32_0 = arith.constant 0 : i32
    %c0_i32_1 = arith.constant 0 : i32
    return %c0_i32, %c0_i32_0 : i32, i32
  }
  func.func @transform_2(%arg0: i32) -> (i32, i32) {
    %c0_i32 = arith.constant 0 : i32
    %c0_i32_0 = arith.constant 0 : i32
    %c0_i32_1 = arith.constant 0 : i32
    return %c0_i32, %c0_i32_0 : i32, i32
  }
  func.func @transform_3(%arg0: i32) -> (i32, i32, i32) {
    %c0_i32 = arith.constant 0 : i32
    %c0_i32_0 = arith.constant 0 : i32
    %c0_i32_1 = arith.constant 0 : i32
    return %arg0, %c0_i32, %c0_i32_0 : i32, i32, i32
  }
}

</mosaic_0001>

<llo_original>
// kernel: tpu_custom_call.1
$region0: #{tpu_custom_call.1}
  #allocation0 [shape = 'u32[]', space=smem, size = 0x4, offset = 0x4, fixed_abs, tag = 'smem constant byte address 0x4 - core index']
  #allocation1 [shape = 'u32[72,128]{1,0:T(1,128)}', space=vmem, size = 0x9000, scoped, tag = 'internal scratch']
  #allocation2 [shape = 'f32[36,384]{1,0:T(8,128)}', space=vmem, size = 0xf000, scoped, tag = 'scratch operand']
  %s0 = inlined_call_operand.hbm [shape: f32[2,4,512], index: 0, kind: input, shape index: {}]
  %s1 = inlined_call_operand.vmem [shape: f32[8,36], index: 1, kind: input, shape index: {}]
  %s2 = inlined_call_operand.vmem [shape: f32[8,1], index: 2, kind: input, shape index: {}]
  %s3 = inlined_call_operand.hbm [shape: f32[2,8,384], index: 3, kind: output, shape index: {}]
  %s4 = sld [smem:[#allocation0]]
  $region49: #{tpu_custom_call.1} parent=0
    _
  %s6 = ssub.s32 1, %s4
  %s7 = scalar_select 0, %s6, %s4
  $region1: #{tpu_custom_call.1} parent=0
    #allocation3 [shape = 'u8[16384]{0}', space=vmem, size = 0x4000, scoped, tag = 'input window, operand 0']
    #allocation4 [shape = 's32[2]{0}', space=sflag, size = 0x8, scoped, tag = 'scoped memory for tpu_custom_call.1']
    #allocation5 [shape = 's32[2]{0}', space=sflag, size = 0x8, scoped, tag = 'scoped memory for tpu_custom_call.1']
    #allocation6 [shape = 'u8[24576]{0}', space=vmem, size = 0x6000, scoped, tag = 'output window, operand 0']
    %8 = vsyncpa [#allocation4], 0
    %s9 = scalar_lea.sflag [#allocation4], 1
    %10 = vsyncpa %s9, 0
    %11 = vsyncpa [#allocation5], 0
    %s12 = scalar_lea.sflag [#allocation5], 1
    %13 = vsyncpa %s12, 0
    loop: start=0, step=1, limit=4
    $region2: #{tpu_custom_call.1} parent=1 // loop_pre_header
      _
    $region3: #{tpu_custom_call.1} parent=1 // loop_header
      %s15 = sphi 0, %s19
      %p16 = scmp.ge.s32.totalorder %s15, 4
      %s25 = sphi 0, %s27
      %s28 = sphi 0, %s25
      %s29 = sphi 0, %s28
      %s45 = sphi 0, %s29
      %s49 = sphi 0, %s49
      %s51 = sphi 0, %s49
      %s52 = sphi 0, %s51
      %s66 = sphi 0, %s52
      %s70 = sphi 0, %s70
      %s72 = sphi 0, %s70
      %s73 = sphi 0, %s72
      %s87 = sphi 0, %s73
      %s93 = sphi 0, %s95
      %s96 = sphi 0, %s93
      %s97 = sphi 0, %s96
      %s113 = sphi 0, %s97
    $region4: #{tpu_custom_call.1} parent=1 // loop_header_branch
      %18 = sbr.rel (%p16) target = $region8
    $region5: #{tpu_custom_call.1} parent=1 // loop_body
      %s20 = ssub.s32 %s15, 1
      %s21 = ssub.s32 %s15, 2
      %s22 = sadd.s32 %s15, 1
      %s23 = ssub.s32 %s15, %s22
      %p24 = scmp.eq.s32.totalorder %s23, 0
      %s26 = sadd.s32 %s25, 1
      %s27 = scalar_select %p24, %s25, %s26
      %p30 = pneg %p24
      %p31 = scmp.eq.s32.totalorder %s15, 1
      %p32 = por %p30, %p31
      %p33 = scmp.ne.s32.totalorder %s25, %s28
      %p34 = scmp.eq.s32.totalorder %s15, 0
      %p35 = por %p33, %p34
      %p36 = scmp.ne.s32.totalorder %s25, %s28
      %p37 = scmp.eq.s32.totalorder %s20, 1
      %p38 = por %p36, %p37
      %p39 = scmp.ne.s32.totalorder %s28, %s29
      %p40 = scmp.eq.s32.totalorder %s20, 0
      %p41 = por %p39, %p40
      %p42 = scmp.ne.s32.totalorder %s28, %s29
      %p43 = scmp.eq.s32.totalorder %s21, 1
      %p44 = por %p42, %p43
      %p46 = scmp.ne.s32.totalorder %s29, %s45
      %p47 = scmp.eq.s32.totalorder %s21, 0
      %p48 = por %p46, %p47
      %s50 = sadd.s32 %s49, 1
      %p53 = scmp.eq.s32.totalorder %s15, 1
      %p54 = scmp.ne.s32.totalorder %s49, %s51
      %p55 = scmp.eq.s32.totalorder %s15, 0
      %p56 = por %p54, %p55
      %p57 = scmp.ne.s32.totalorder %s49, %s51
      %p58 = scmp.eq.s32.totalorder %s20, 1
      %p59 = por %p57, %p58
      %p60 = scmp.ne.s32.totalorder %s51, %s52
      %p61 = scmp.eq.s32.totalorder %s20, 0
      %p62 = por %p60, %p61
      %p63 = scmp.ne.s32.totalorder %s51, %s52
      %p64 = scmp.eq.s32.totalorder %s21, 1
      %p65 = por %p63, %p64
      %p67 = scmp.ne.s32.totalorder %s52, %s66
      %p68 = scmp.eq.s32.totalorder %s21, 0
      %p69 = por %p67, %p68
      %s71 = sadd.s32 %s70, 1
      %p74 = scmp.eq.s32.totalorder %s15, 1
      %p75 = scmp.ne.s32.totalorder %s70, %s72
      %p76 = scmp.eq.s32.totalorder %s15, 0
      %p77 = por %p75, %p76
      %p78 = scmp.ne.s32.totalorder %s70, %s72
      %p79 = scmp.eq.s32.totalorder %s20, 1
      %p80 = por %p78, %p79
      %p81 = scmp.ne.s32.totalorder %s72, %s73
      %p82 = scmp.eq.s32.totalorder %s20, 0
      %p83 = por %p81, %p82
      %p84 = scmp.ne.s32.totalorder %s72, %s73
      %p85 = scmp.eq.s32.totalorder %s21, 1
      %p86 = por %p84, %p85
      %p88 = scmp.ne.s32.totalorder %s73, %s87
      %p89 = scmp.eq.s32.totalorder %s21, 0
      %p90 = por %p88, %p89
      %s91 = ssub.s32 %s15, %s22
      %p92 = scmp.eq.s32.totalorder %s91, 0
      %s94 = sadd.s32 %s93, 1
      %s95 = scalar_select %p92, %s93, %s94
      %p98 = pneg %p92
      %p99 = scmp.eq.s32.totalorder %s15, 1
      %p100 = por %p98, %p99
      %p101 = scmp.ne.s32.totalorder %s93, %s96
      %p102 = scmp.eq.s32.totalorder %s15, 0
      %p103 = por %p101, %p102
      %p104 = scmp.ne.s32.totalorder %s93, %s96
      %p105 = scmp.eq.s32.totalorder %s20, 1
      %p106 = por %p104, %p105
      %p107 = scmp.ne.s32.totalorder %s96, %s97
      %p108 = scmp.eq.s32.totalorder %s20, 0
      %p109 = por %p107, %p108
      %p110 = scmp.ne.s32.totalorder %s96, %s97
      %p111 = scmp.eq.s32.totalorder %s21, 1
      %p112 = por %p110, %p111
      %p114 = scmp.ne.s32.totalorder %s97, %s113
      %p115 = scmp.eq.s32.totalorder %s21, 0
      %p116 = por %p114, %p115
      %p117 = scmp.le.s32.totalorder 1, %s15
      %p118 = scmp.lt.s32.totalorder %s15, 3
      %p119 = pnand %p117, %p118
      %p120 = pneg %p119
      // Predicated region
      $region9: #{tpu_custom_call.1} parent=5 // pred_check
        _
      $region10: #{tpu_custom_call.1} parent=5 // pred_check_branch
        %122 = sbr.rel (%p119) target = $region12
      $region11: #{tpu_custom_call.1} parent=5 // pred_region
        %s123 = ssub.s32 %s15, 1
        // Predicated region
        $region13: #{tpu_custom_call.1} parent=11 // pred_check
          %p124 = pneg %p62
        $region14: #{tpu_custom_call.1} parent=11 // pred_check_branch
          %126 = sbr.rel (%p124) target = $region16
        $region15: #{tpu_custom_call.1} parent=11 // pred_region
          _
        $region16: #{tpu_custom_call.1} parent=11 // pred_fallthru
          _
        // Predicated region
        $region17: #{tpu_custom_call.1} parent=11 // pred_check
          %p127 = pneg %p83
        $region18: #{tpu_custom_call.1} parent=11 // pred_check_branch
          %129 = sbr.rel (%p127) target = $region20
        $region19: #{tpu_custom_call.1} parent=11 // pred_region
          _
        $region20: #{tpu_custom_call.1} parent=11 // pred_fallthru
          _
      $region12: #{tpu_custom_call.1} parent=5 // pred_fallthru
        _
      %p130 = scmp.lt.s32.totalorder %s15, 2
      // Predicated region
      $region21: #{tpu_custom_call.1} parent=5 // pred_check
        %p131 = pneg %p130
      $region22: #{tpu_custom_call.1} parent=5 // pred_check_branch
        %133 = sbr.rel (%p131) target = $region24
      $region23: #{tpu_custom_call.1} parent=5 // pred_region
        // Predicated region
        $region25: #{tpu_custom_call.1} parent=23 // pred_check
          %p134 = pneg %p35
        $region26: #{tpu_custom_call.1} parent=23 // pred_check_branch
          %136 = sbr.rel (%p134) target = $region28
        $region27: #{tpu_custom_call.1} parent=23 // pred_region
          %s137 = sand.u32 %s25, 1
          %s138 = scalar_lea.sflag [#allocation4], %s137
          %s139 = sand.u32 %s25, 1
          %s140 = smul.addr %s139, 16
          %s141 = scalar_lea.vmem [#allocation3], %s140
          %143 = vsyncadd %s138, 0
          %s144 = smul.addr %s15, 4
          %s145 = smul.addr %s144, 4
          %s146 = scalar_lea.hbm %s0, %s145
          %s148 = sshll.u32 %s146, 4
          %s149 = int_to_ptr.hbm [resolvable:$true] %s148
          %s150 = sshll.u32 %s141, 4
          %s151 = int_to_ptr.vmem [resolvable:$true] %s150
          %153 = dma.hbm_to_vmem [thread:$0]  %s149, 256, %s151, %s138
        $region28: #{tpu_custom_call.1} parent=23 // pred_fallthru
          _
      $region24: #{tpu_custom_call.1} parent=5 // pred_fallthru
        _
      %p154 = scmp.le.s32.totalorder 1, %s15
      %p155 = scmp.lt.s32.totalorder %s15, 3
      %p156 = pnand %p154, %p155
      %p157 = pneg %p156
      // Predicated region
      $region29: #{tpu_custom_call.1} parent=5 // pred_check
        _
      $region30: #{tpu_custom_call.1} parent=5 // pred_check_branch
        %159 = sbr.rel (%p156) target = $region32
      $region31: #{tpu_custom_call.1} parent=5 // pred_region
        %s160 = ssub.s32 %s15, 1
        %s161 = sand.u32 %s28, 1
        %s162 = scalar_lea.sflag [#allocation4], %s161
        %s163 = sand.u32 %s28, 1
        %s164 = smul.addr %s163, 16
        %s165 = scalar_lea.vmem [#allocation3], %s164
        // Predicated region
        $region33: #{tpu_custom_call.1} parent=31 // pred_check
          %p166 = pneg %p41
        $region34: #{tpu_custom_call.1} parent=31 // pred_check_branch
          %168 = sbr.rel (%p166) target = $region36
        $region35: #{tpu_custom_call.1} parent=31 // pred_region
          %170 = dma.done %s162, 256
        $region36: #{tpu_custom_call.1} parent=31 // pred_fallthru
          _
        %s171 = sand.u32 %s28, 1
        %s172 = scalar_lea.sflag [#allocation4], %s171
        %s173 = sand.u32 %s28, 1
        %s174 = smul.addr %s173, 16
        %s175 = scalar_lea.vmem [#allocation3], %s174
        %p176 = pneg %p41
        %p177 = pneg %p38
        %p178 = pneg %p62
        %p179 = pneg %p59
        %p180 = pneg %p83
        %p181 = pneg %p80
        %p182 = pneg %p109
        %p183 = pneg %p106
        %s184 = sand.u32 %s96, 1
        %s185 = scalar_lea.sflag [#allocation5], %s184
        %s186 = sand.u32 %s96, 1
        %s187 = smul.addr %s186, 24
        %s188 = scalar_lea.vmem [#allocation6], %s187
        %v189 = vld [vmem:[%s165] sm:$0xff]
        %v190 = vld [vmem:[%s165 + $0x8] sm:$0xff]
        %193 = vst [vmem:[#allocation1] ss:$2 sm:$0xff] %v189
        %s194 = scalar_lea.vmem [#allocation1], 16
        %195 = vst [vmem:[%s194] ss:$2 sm:$0xff] %v190
        %v196 = vld.sshfl [vmem:[#allocation1] sm:$0xff pattern:$0x75316420]
        %v197 = vld.sshfl [vmem:[#allocation1 + $0x8] sm:$0xff pattern:$0x75316420]
        %v198 = vld.sshfl [vmem:[#allocation1 + $0x10] sm:$0xff pattern:$0x75316420]
        %202 = vst [vmem:[#allocation2] sm:$0xf] %v196
        %203 = vst [vmem:[#allocation2 + $0x8] sm:$0xf] %v197
        %204 = vst [vmem:[#allocation2 + $0x10] sm:$0xf] %v198
        %s205 = scalar_lea.vmem [#allocation1], 1
        %206 = vst [vmem:[%s205] ss:$2 sm:$0xff] %v189
        %s207 = scalar_lea.vmem [#allocation1], 17
        %208 = vst [vmem:[%s207] ss:$2 sm:$0xff] %v190
        %v209 = vld.sshfl [vmem:[#allocation1] sm:$0xff pattern:$0x75316420]
        %v210 = vld.sshfl [vmem:[#allocation1 + $0x8] sm:$0xff pattern:$0x75316420]
        %v211 = vld.sshfl [vmem:[#allocation1 + $0x10] sm:$0xff pattern:$0x75316420]
        %v212 = vld.sshfl [vmem:[#allocation1 + $0x18] sm:$0xff pattern:$0x75316420]
        %213 = vrot.lane.b32.xlu0 %v209, 127
        %v214 = vpop.permute.xlu0 %213
        %215 = vrot.lane.b32.xlu0 %v210, 127
        %v216 = vpop.permute.xlu0 %215
        %217 = vrot.lane.b32.xlu0 %v211, 127
        %v218 = vpop.permute.xlu0 %217
        %219 = vrot.lane.b32.xlu0 %v212, 127
        %v220 = vpop.permute.xlu0 %219
        %vm221 = vcmask 1039360
        %v222 = vsel %vm221, %v214, %v216
        %v223 = vsel %vm221, %v216, %v218
        %v224 = vsel %vm221, %v218, %v220
        %228 = vst [vmem:[#allocation2] sm:$0xf0] %v222
        %229 = vst [vmem:[#allocation2 + $0x8] sm:$0xf0] %v223
        %230 = vst [vmem:[#allocation2 + $0x10] sm:$0xf0] %v224
        %231 = vst [vmem:[#allocation1] ss:$2 sm:$0xff] %v189
        %s232 = scalar_lea.vmem [#allocation1], 16
        %233 = vst [vmem:[%s232] ss:$2 sm:$0xff] %v190
        %v234 = vld.sshfl [vmem:[#allocation1] sm:$0xff pattern:$0x75316420]
        %v235 = vld.sshfl [vmem:[#allocation1 + $0x8] sm:$0xff pattern:$0x75316420]
        %v236 = vld.sshfl [vmem:[#allocation1 + $0x10] sm:$0xff pattern:$0x75316420]
        %v237 = vld.sshfl [vmem:[#allocation1 + $0x18] sm:$0xff pattern:$0x75316420]
        %238 = vrot.lane.b32.xlu0 %v234, 126
        %v239 = vpop.permute.xlu0 %238
        %240 = vrot.lane.b32.xlu0 %v235, 126
        %v241 = vpop.permute.xlu0 %240
        %242 = vrot.lane.b32.xlu0 %v236, 126
        %v243 = vpop.permute.xlu0 %242
        %244 = vrot.lane.b32.xlu0 %v237, 126
        %v245 = vpop.permute.xlu0 %244
        %vm246 = vcmask 1031168
        %v247 = vsel %vm246, %v239, %v241
        %v248 = vsel %vm246, %v241, %v243
        %v249 = vsel %vm246, %v243, %v245
        %253 = vst [vmem:[#allocation2 + $0x18] sm:$0xf] %v247
        %254 = vst [vmem:[#allocation2 + $0x20] sm:$0xf] %v248
        %255 = vst [vmem:[#allocation2 + $0x28] sm:$0xf] %v249
        %s256 = scalar_lea.vmem [#allocation1], 1
        %257 = vst [vmem:[%s256] ss:$2 sm:$0xff] %v189
        %s258 = scalar_lea.vmem [#allocation1], 17
        %259 = vst [vmem:[%s258] ss:$2 sm:$0xff] %v190
        %v260 = vld.sshfl [vmem:[#allocation1] sm:$0xff pattern:$0x75316420]
        %v261 = vld.sshfl [vmem:[#allocation1 + $0x8] sm:$0xff pattern:$0x75316420]
        %v262 = vld.sshfl [vmem:[#allocation1 + $0x10] sm:$0xff pattern:$0x75316420]
        %v263 = vld.sshfl [vmem:[#allocation1 + $0x18] sm:$0xff pattern:$0x75316420]
        %264 = vrot.lane.b32.xlu0 %v260, 110
        %v265 = vpop.permute.xlu0 %264
        %266 = vrot.lane.b32.xlu0 %v261, 110
        %v267 = vpop.permute.xlu0 %266
        %268 = vrot.lane.b32.xlu0 %v262, 110
        %v269 = vpop.permute.xlu0 %268
        %270 = vrot.lane.b32.xlu0 %v263, 110
        %v271 = vpop.permute.xlu0 %270
        %vm272 = vcmask 900096
        %v273 = vsel %vm272, %v265, %v267
        %v274 = vsel %vm272, %v267, %v269
        %v275 = vsel %vm272, %v269, %v271
        %279 = vst [vmem:[#allocation2 + $0x18] sm:$0xf0] %v273
        %280 = vst [vmem:[#allocation2 + $0x20] sm:$0xf0] %v274
        %281 = vst [vmem:[#allocation2 + $0x28] sm:$0xf0] %v275
        %282 = vst [vmem:[#allocation1] ss:$2 sm:$0xff] %v189
        %s283 = scalar_lea.vmem [#allocation1], 16
        %284 = vst [vmem:[%s283] ss:$2 sm:$0xff] %v190
        %v285 = vld.sshfl [vmem:[#allocation1] sm:$0xff pattern:$0x75316420]
        %v286 = vld.sshfl [vmem:[#allocation1 + $0x8] sm:$0xff pattern:$0x75316420]
        %v287 = vld.sshfl [vmem:[#allocation1 + $0x10] sm:$0xff pattern:$0x75316420]
        %v288 = vld.sshfl [vmem:[#allocation1 + $0x18] sm:$0xff pattern:$0x75316420]
        %289 = vrot.lane.b32.xlu0 %v285, 109
        %v290 = vpop.permute.xlu0 %289
        %291 = vrot.lane.b32.xlu0 %v286, 109
        %v292 = vpop.permute.xlu0 %291
        %293 = vrot.lane.b32.xlu0 %v287, 109
        %v294 = vpop.permute.xlu0 %293
        %295 = vrot.lane.b32.xlu0 %v288, 109
        %v296 = vpop.permute.xlu0 %295
        %vm297 = vcmask 891904
        %v298 = vsel %vm297, %v290, %v292
        %v299 = vsel %vm297, %v292, %v294
        %v300 = vsel %vm297, %v294, %v296
        %304 = vst [vmem:[#allocation2 + $0x30] sm:$0xf] %v298
        %305 = vst [vmem:[#allocation2 + $0x38] sm:$0xf] %v299
        %306 = vst [vmem:[#allocation2 + $0x40] sm:$0xf] %v300
        %s307 = scalar_lea.vmem [#allocation1], 1
        %308 = vst [vmem:[%s307] ss:$2 sm:$0xff] %v189
        %s309 = scalar_lea.vmem [#allocation1], 17
        %310 = vst [vmem:[%s309] ss:$2 sm:$0xff] %v190
        %v311 = vld.sshfl [vmem:[#allocation1] sm:$0xff pattern:$0x75316420]
        %v312 = vld.sshfl [vmem:[#allocation1 + $0x8] sm:$0xff pattern:$0x75316420]
        %v313 = vld.sshfl [vmem:[#allocation1 + $0x10] sm:$0xff pattern:$0x75316420]
        %v314 = vld.sshfl [vmem:[#allocation1 + $0x18] sm:$0xff pattern:$0x75316420]
        %315 = vrot.lane.b32.xlu0 %v311, 108
        %v316 = vpop.permute.xlu0 %315
        %317 = vrot.lane.b32.xlu0 %v312, 108
        %v318 = vpop.permute.xlu0 %317
        %319 = vrot.lane.b32.xlu0 %v313, 108
        %v320 = vpop.permute.xlu0 %319
        %321 = vrot.lane.b32.xlu0 %v314, 108
        %v322 = vpop.permute.xlu0 %321
        %vm323 = vcmask 883712
        %v324 = vsel %vm323, %v316, %v318
        %v325 = vsel %vm323, %v318, %v320
        %v326 = vsel %vm323, %v320, %v322
        %330 = vst [vmem:[#allocation2 + $0x30] sm:$0xf0] %v324
        %331 = vst [vmem:[#allocation2 + $0x38] sm:$0xf0] %v325
        %332 = vst [vmem:[#allocation2 + $0x40] sm:$0xf0] %v326
        %333 = vst [vmem:[#allocation1] ss:$2 sm:$0xff] %v189
        %s334 = scalar_lea.vmem [#allocation1], 16
        %335 = vst [vmem:[%s334] ss:$2 sm:$0xff] %v190
        %v336 = vld.sshfl [vmem:[#allocation1] sm:$0xff pattern:$0x75316420]
        %v337 = vld.sshfl [vmem:[#allocation1 + $0x8] sm:$0xff pattern:$0x75316420]
        %v338 = vld.sshfl [vmem:[#allocation1 + $0x10] sm:$0xff pattern:$0x75316420]
        %v339 = vld.sshfl [vmem:[#allocation1 + $0x18] sm:$0xff pattern:$0x75316420]
        %340 = vrot.lane.b32.xlu0 %v336, 92
        %v341 = vpop.permute.xlu0 %340
        %342 = vrot.lane.b32.xlu0 %v337, 92
        %v343 = vpop.permute.xlu0 %342
        %344 = vrot.lane.b32.xlu0 %v338, 92
        %v345 = vpop.permute.xlu0 %344
        %346 = vrot.lane.b32.xlu0 %v339, 92
        %v347 = vpop.permute.xlu0 %346
        %vm348 = vcmask 752640
        %v349 = vsel %vm348, %v341, %v343
        %v350 = vsel %vm348, %v343, %v345
        %v351 = vsel %vm348, %v345, %v347
        %355 = vst [vmem:[#allocation2 + $0x48] sm:$0xf] %v349
        %356 = vst [vmem:[#allocation2 + $0x50] sm:$0xf] %v350
        %357 = vst [vmem:[#allocation2 + $0x58] sm:$0xf] %v351
        %s358 = scalar_lea.vmem [#allocation1], 1
        %359 = vst [vmem:[%s358] ss:$2 sm:$0xff] %v189
        %s360 = scalar_lea.vmem [#allocation1], 17
        %361 = vst [vmem:[%s360] ss:$2 sm:$0xff] %v190
        %v362 = vld.sshfl [vmem:[#allocation1] sm:$0xff pattern:$0x75316420]
        %v363 = vld.sshfl [vmem:[#allocation1 + $0x8] sm:$0xff pattern:$0x75316420]
        %v364 = vld.sshfl [vmem:[#allocation1 + $0x10] sm:$0xff pattern:$0x75316420]
        %v365 = vld.sshfl [vmem:[#allocation1 + $0x18] sm:$0xff pattern:$0x75316420]
        %366 = vrot.lane.b32.xlu0 %v362, 91
        %v367 = vpop.permute.xlu0 %366
        %368 = vrot.lane.b32.xlu0 %v363, 91
        %v369 = vpop.permute.xlu0 %368
        %370 = vrot.lane.b32.xlu0 %v364, 91
        %v371 = vpop.permute.xlu0 %370
        %372 = vrot.lane.b32.xlu0 %v365, 91
        %v373 = vpop.permute.xlu0 %372
        %vm374 = vcmask 744448
        %v375 = vsel %vm374, %v367, %v369
        %v376 = vsel %vm374, %v369, %v371
        %v377 = vsel %vm374, %v371, %v373
        %381 = vst [vmem:[#allocation2 + $0x48] sm:$0xf0] %v375
        %382 = vst [vmem:[#allocation2 + $0x50] sm:$0xf0] %v376
        %383 = vst [vmem:[#allocation2 + $0x58] sm:$0xf0] %v377
        %384 = vst [vmem:[#allocation1] ss:$2 sm:$0xff] %v189
        %s385 = scalar_lea.vmem [#allocation1], 16
        %386 = vst [vmem:[%s385] ss:$2 sm:$0xff] %v190
        %v387 = vld.sshfl [vmem:[#allocation1] sm:$0xff pattern:$0x75316420]
        %v388 = vld.sshfl [vmem:[#allocation1 + $0x8] sm:$0xff pattern:$0x75316420]
        %v389 = vld.sshfl [vmem:[#allocation1 + $0x10] sm:$0xff pattern:$0x75316420]
        %v390 = vld.sshfl [vmem:[#allocation1 + $0x18] sm:$0xff pattern:$0x75316420]
        %391 = vrot.lane.b32.xlu0 %v387, 90
        %v392 = vpop.permute.xlu0 %391
        %393 = vrot.lane.b32.xlu0 %v388, 90
        %v394 = vpop.permute.xlu0 %393
        %395 = vrot.lane.b32.xlu0 %v389, 90
        %v396 = vpop.permute.xlu0 %395
        %397 = vrot.lane.b32.xlu0 %v390, 90
        %v398 = vpop.permute.xlu0 %397
        %vm399 = vcmask 736256
        %v400 = vsel %vm399, %v392, %v394
        %v401 = vsel %vm399, %v394, %v396
        %v402 = vsel %vm399, %v396, %v398
        %406 = vst [vmem:[#allocation2 + $0x60] sm:$0xf] %v400
        %407 = vst [vmem:[#allocation2 + $0x68] sm:$0xf] %v401
        %408 = vst [vmem:[#allocation2 + $0x70] sm:$0xf] %v402
        %v409 = vld [vmem:[%s1] sm:$0xff]
        %v410 = vld [vmem:[#allocation2] sm:$0xff]
        %v411 = vld [vmem:[#allocation2 + $0x8] sm:$0xff]
        %v412 = vld [vmem:[#allocation2 + $0x10] sm:$0xff]
        %v413 = vld [vmem:[#allocation2 + $0x18] sm:$0xff]
        %v414 = vld [vmem:[#allocation2 + $0x20] sm:$0xff]
        %v415 = vld [vmem:[#allocation2 + $0x28] sm:$0xff]
        %v416 = vld [vmem:[#allocation2 + $0x30] sm:$0xff]
        %v417 = vld [vmem:[#allocation2 + $0x38] sm:$0xff]
        %v418 = vld [vmem:[#allocation2 + $0x40] sm:$0xff]
        %v419 = vld [vmem:[#allocation2 + $0x48] sm:$0xff]
        %v420 = vld [vmem:[#allocation2 + $0x50] sm:$0xff]
        %v421 = vld [vmem:[#allocation2 + $0x58] sm:$0xff]
        %v422 = vld [vmem:[#allocation2 + $0x60] sm:$0xf]
        %v423 = vld [vmem:[#allocation2 + $0x68] sm:$0xf]
        %v424 = vld [vmem:[#allocation2 + $0x70] sm:$0xf]
        %v425 = vld [vmem:[%s2] sm:$0xff]
        %427 = vset.pattern.permute.xlu0 0
        %428 = vperm.xlu0 %427, %v425
        %v429 = vpop.permute.xlu0 %428
        %vm431 = vcmask 293888
        %v433 = vsel %vm431, %v409, 0
        %vm435 = vcmask 1043456
        %v437 = vsel %vm435, %v422, 0
        %v440 = vsel %vm435, %v423, 0
        %v443 = vsel %vm435, %v424, 0
        %445 = vmatpush.msra.mxu0 0.0
        %446 = vmatpush.msra.mxu0 0.0
        %447 = vmatpush.msra.mxu0 0.0
        %448 = vmatpush.msra.mxu0 0.0
        %449 = vmatpush.msra.mxu0 0.0
        %450 = vmatpush.msra.mxu0 0.0
        %451 = vmatpush.msra.mxu0 0.0
        %452 = vmatpush.msra.mxu0 0.0
        %453 = vmatpush.msra.mxu0 0.0
        %454 = vmatpush.msra.mxu0 0.0
        %455 = vmatpush.msra.mxu0 0.0
        %456 = vmatpush.msra.mxu0 %v437
        %457 = vmatpush.msra.mxu0 %v419
        %458 = vmatpush.msra.mxu0 %v416
        %459 = vmatpush.msra.mxu0 %v413
        %460 = vmatpush.msra.mxu0 %v410
        %461 = vmatmul.f32.gmra.mxu0 %v433
        %v462 = vpop.f32.mrf.mxu0
        %v463 = vadd.f32 %v429, %v462
        %464 = vdwg.mxu0
        %465 = vmatpush.msra.mxu0 0.0
        %466 = vmatpush.msra.mxu0 0.0
        %467 = vmatpush.msra.mxu0 0.0
        %468 = vmatpush.msra.mxu0 0.0
        %469 = vmatpush.msra.mxu0 0.0
        %470 = vmatpush.msra.mxu0 0.0
        %471 = vmatpush.msra.mxu0 0.0
        %472 = vmatpush.msra.mxu0 0.0
        %473 = vmatpush.msra.mxu0 0.0
        %474 = vmatpush.msra.mxu0 0.0
        %475 = vmatpush.msra.mxu0 0.0
        %476 = vmatpush.msra.mxu0 %v440
        %477 = vmatpush.msra.mxu0 %v420
        %478 = vmatpush.msra.mxu0 %v417
        %479 = vmatpush.msra.mxu0 %v414
        %480 = vmatpush.msra.mxu0 %v411
        %481 = vmatmul.f32.gmra.mxu0 %v433
        %v482 = vpop.f32.mrf.mxu0
        %v483 = vadd.f32 %v429, %v482
        %484 = vdwg.mxu0
        %485 = vmatpush.msra.mxu0 0.0
        %486 = vmatpush.msra.mxu0 0.0
        %487 = vmatpush.msra.mxu0 0.0
        %488 = vmatpush.msra.mxu0 0.0
        %489 = vmatpush.msra.mxu0 0.0
        %490 = vmatpush.msra.mxu0 0.0
        %491 = vmatpush.msra.mxu0 0.0
        %492 = vmatpush.msra.mxu0 0.0
        %493 = vmatpush.msra.mxu0 0.0
        %494 = vmatpush.msra.mxu0 0.0
        %495 = vmatpush.msra.mxu0 0.0
        %496 = vmatpush.msra.mxu0 %v443
        %497 = vmatpush.msra.mxu0 %v421
        %498 = vmatpush.msra.mxu0 %v418
        %499 = vmatpush.msra.mxu0 %v415
        %500 = vmatpush.msra.mxu0 %v412
        %501 = vmatmul.f32.gmra.mxu0 %v433
        %v502 = vpop.f32.mrf.mxu0
        %v503 = vadd.f32 %v429, %v502
        %504 = vdwg.mxu0
        %505 = vst [vmem:[%s188] sm:$0xff] %v463
        %506 = vst [vmem:[%s188 + $0x8] sm:$0xff] %v483
        %507 = vst [vmem:[%s188 + $0x10] sm:$0xff] %v503
        %s508 = sand.u32 %s96, 1
        %s509 = scalar_lea.sflag [#allocation5], %s508
        %s510 = sand.u32 %s96, 1
        %s511 = smul.addr %s510, 24
        %s512 = scalar_lea.vmem [#allocation6], %s511
        // Predicated region
        $region37: #{tpu_custom_call.1} parent=31 // pred_check
          %p513 = pneg %p106
        $region38: #{tpu_custom_call.1} parent=31 // pred_check_branch
          %515 = sbr.rel (%p513) target = $region40
        $region39: #{tpu_custom_call.1} parent=31 // pred_region
          %517 = vsyncadd %s509, 0
          %s518 = smul.addr %s20, 3
          %s519 = smul.addr %s518, 8
          %s520 = scalar_lea.hbm %s3, %s519
          %s522 = sshll.u32 %s512, 4
          %s523 = int_to_ptr.vmem [resolvable:$true] %s522
          %s524 = sshll.u32 %s520, 4
          %s525 = int_to_ptr.hbm [resolvable:$true] %s524
          %527 = dma.vmem_to_hbm [thread:$0]  %s523, 384, %s525, %s509
        $region40: #{tpu_custom_call.1} parent=31 // pred_fallthru
          _
      $region32: #{tpu_custom_call.1} parent=5 // pred_fallthru
        _
      %p528 = scmp.le.s32.totalorder 2, %s15
      // Predicated region
      $region41: #{tpu_custom_call.1} parent=5 // pred_check
        %p529 = pneg %p528
      $region42: #{tpu_custom_call.1} parent=5 // pred_check_branch
        %531 = sbr.rel (%p529) target = $region44
      $region43: #{tpu_custom_call.1} parent=5 // pred_region
        %s532 = ssub.s32 %s15, 2
        // Predicated region
        $region45: #{tpu_custom_call.1} parent=43 // pred_check
          %p533 = pneg %p112
        $region46: #{tpu_custom_call.1} parent=43 // pred_check_branch
          %535 = sbr.rel (%p533) target = $region48
        $region47: #{tpu_custom_call.1} parent=43 // pred_region
          %s536 = sand.u32 %s97, 1
          %s537 = scalar_lea.sflag [#allocation5], %s536
          %s538 = sand.u32 %s97, 1
          %s539 = smul.addr %s538, 24
          %s540 = scalar_lea.vmem [#allocation6], %s539
          %542 = dma.done %s537, 384
        $region48: #{tpu_custom_call.1} parent=43 // pred_fallthru
          _
      $region44: #{tpu_custom_call.1} parent=5 // pred_fallthru
        _
    $region6: #{tpu_custom_call.1} parent=1 // loop_footer
      %s19 = sadd.s32 1, %s15
    $region7: #{tpu_custom_call.1} parent=1 // loop_footer_branch
      %14 = sbr.rel target = $region3
    $region8: #{tpu_custom_call.1} parent=1 // loop_exit
      _
    %543 = vsyncpa [#allocation4], 1
    %s544 = scalar_lea.sflag [#allocation4], 1
    %545 = vsyncpa %s544, 1
    %546 = vsyncpa [#allocation5], 1
    %s547 = scalar_lea.sflag [#allocation5], 1
    %548 = vsyncpa %s547, 1

</llo_original>
